<compile_context>
chip_gen: v5e
topology: v5e:2x2
jax: 0.10.0
libtpu: 0.0.40
codegen_flags: <defaults>
</compile_context>

<pallas_src>
import jax
import jax.numpy as jnp
from jax.experimental import pallas as pl
from jax.experimental.pallas import tpu as pltpu


def _round_up(x: int, m: int) -> int:
    return ((x + m - 1) // m) * m


def _pad_len(seqlen: int, multiple: int) -> int:
    """Integer port of pad_to_multiple's remainder computation."""
    return (-seqlen) % multiple


def _pick_tile(d: int, preferred=(512, 256, 128)) -> int:
    """Largest preferred tile dividing d (256-multiples feed the 256-wide MXU
    on v6e/v7x); fall back to the full extent (always a legal block)."""
    for c in preferred:
        if d % c == 0:
            return c
    return d


# --------------------------- kernels ---------------------------

def _proj_resident_kernel(x_ref, w_ref, o_ref):
    # x tile streamed at its HBM dtype, cast to the MXU compute dtype
    # in-register; f32 accumulation; lane-dense unmasked store.
    o_ref[...] = jnp.dot(
        x_ref[...].astype(w_ref.dtype), w_ref[...],
        preferred_element_type=jnp.float32,
    ).astype(o_ref.dtype)


def _proj_tiled_kernel(x_ref, w_ref, o_ref, acc_ref):
    # (rows, N, K)-tiled path for weights too large to keep VMEM-resident
    # (v7x: 64 MiB physical / 32 MiB default-scoped VMEM). K is the last,
    # "arbitrary" grid axis; init/finalize via pl.when.
    @pl.when(pl.program_id(3) == 0)
    def _():
        acc_ref[...] = jnp.zeros_like(acc_ref)

    acc_ref[...] += jnp.dot(
        x_ref[...].astype(w_ref.dtype), w_ref[...],
        preferred_element_type=jnp.float32,
    )

    @pl.when(pl.program_id(3) == pl.num_programs(3) - 1)
    def _():
        o_ref[...] = acc_ref[...].astype(o_ref.dtype)


# --------------------------- wrapper ---------------------------

_SINGLE_BUFFER_WEIGHT_OK = True   # flipped off if pl.Buffered(1) is rejected


def _token_projection(x, w, *, compute_dtype=jnp.bfloat16, row_tile=1024,
                      max_resident_weight_bytes=8 << 20):
    """Per-token projection out[b, s, :] = x[b, s, :] @ w.

    Writes the (b, t, d) output directly (3-D BlockSpecs) -> no wrapper
    reshape / slice / cast passes over HBM.
    """
    global _SINGLE_BUFFER_WEIGHT_OK
    b, t, d = x.shape
    assert w.shape == (d, d)

    x_it = jnp.dtype(x.dtype).itemsize
    o_it = x_it                                  # output keeps x.dtype
    c_it = jnp.dtype(compute_dtype).itemsize

    # Weight is tiny vs. x: cast once in the wrapper. x tiles are cast
    # in-kernel so x is read from HBM exactly once, at its original dtype.
    wc = w.astype(compute_dtype)

    # Row (sequence) tile: sublane-aligned, as large as row_tile allows, but
    # clamped so the total grid keeps >= ~4 steps (double-buffer overlap and
    # v7x megacore sharding across its 2 TensorCores).
    target_seq_tiles = max(1, min(pl.cdiv(t, 8), pl.cdiv(4, b)))
    rt = max(8, min(_round_up(row_tile, 8),
                    _round_up(pl.cdiv(t, target_seq_tiles), 8)))
    nt = pl.cdiv(t, rt)    # ragged last block: OOB rows are read as garbage but
                           # each row is independent and OOB writes are dropped.

    cost = pl.CostEstimate(
        flops=2 * b * t * d * d,
        transcendentals=0,
        bytes_accessed=b * t * d * (x_it + o_it) + d * d * c_it,
    )
    out_shape = jax.ShapeDtypeStruct((b, t, d), x.dtype)

    if d * d * c_it <= max_resident_weight_bytes:
        # ------------- resident-weight path -------------
        def build(single_buffer_weight):
            w_kwargs = {}
            n_wbuf = 2
            if single_buffer_weight:
                # Constant block index -> one buffer is enough; halves the
                # weight's VMEM footprint (matters once d grows).
                w_kwargs["pipeline_mode"] = pl.Buffered(1)
                n_wbuf = 1
            plan = (2 * rt * d * x_it            # x tiles, double-buffered
                    + 2 * rt * d * o_it          # out tiles, double-buffered
                    + n_wbuf * d * d * c_it)     # resident weight
            return pl.pallas_call(
                _proj_resident_kernel,
                grid=(b, nt),
                in_specs=[
                    pl.BlockSpec((None, rt, d), lambda ib, it_: (ib, it_, 0)),
                    pl.BlockSpec((d, d), lambda ib, it_: (0, 0), **w_kwargs),
                ],
                out_specs=pl.BlockSpec((None, rt, d),
                                       lambda ib, it_: (ib, it_, 0)),
                out_shape=out_shape,
                compiler_params=pltpu.CompilerParams(
                    dimension_semantics=("parallel", "parallel"),
                    vmem_limit_bytes=min(128 << 20,
                                         max(32 << 20, int(plan * 1.5))),
                ),
                cost_estimate=cost,
            )

        if _SINGLE_BUFFER_WEIGHT_OK:
            try:
                return build(True)(x, wc)
            except Exception:
                # pipeline_mode=pl.Buffered(1) unsupported in this JAX build:
                # fall back to the default double-buffered weight.
                _SINGLE_BUFFER_WEIGHT_OK = False
        return build(False)(x, wc)

    # ------------- (rows, N, K)-tiled path (large d, e.g. v7x budgets) -------------
    tn = _pick_tile(d)
    tk = _pick_tile(d)
    plan = (2 * rt * tk * x_it + 2 * tk * tn * c_it
            + 2 * rt * tn * o_it + rt * tn * 4)
    return pl.pallas_call(
        _proj_tiled_kernel,
        grid=(b, nt, d // tn, d // tk),
        in_specs=[
            pl.BlockSpec((None, rt, tk), lambda ib, ir, jn, kk: (ib, ir, kk)),
            pl.BlockSpec((tk, tn), lambda ib, ir, jn, kk: (kk, jn)),
        ],
        out_specs=pl.BlockSpec((None, rt, tn),
                               lambda ib, ir, jn, kk: (ib, ir, jn)),
        out_shape=out_shape,
        scratch_shapes=[pltpu.VMEM((rt, tn), jnp.float32)],
        compiler_params=pltpu.CompilerParams(
            dimension_semantics=("parallel", "parallel", "parallel",
                                 "arbitrary"),
            vmem_limit_bytes=min(128 << 20, max(32 << 20, int(plan * 1.5))),
        ),
        cost_estimate=cost,
    )(x, wc)


def autopadder_forward(x, w, *, bucket_size=4, num_mem_kv=0, full_attn_thres=0,
                       compute_dtype=jnp.bfloat16, row_tile=1024,
                       max_resident_weight_bytes=8 << 20):
    """Autopadder.forward: pad -> mask -> net(padded x) -> out[:, 0:t].

    The stand-in `net` is a per-token (d, d) projection, so
    net(pad(x))[:, :t] == net(x)[:, :t]: the zero-pad / trailing-slice HBM
    passes are skipped entirely; only the padded-length input_mask is built.
    """
    b, t, d = x.shape
    k_len = 0                                       # `keys` kwarg not supplied
    seqlen = t + num_mem_kv + k_len

    if seqlen > full_attn_thres:
        pad = _pad_len(seqlen, bucket_size * 2)
        # Static layout op -> plain JAX in the wrapper; keeps the kernel's
        # stores unmasked / lane-dense.
        input_mask = jnp.concatenate(
            [jnp.ones((b, t), dtype=jnp.bool_),
             jnp.zeros((b, pad), dtype=jnp.bool_)], axis=1)
    else:
        input_mask = None                           # module leaves kwargs untouched

    out = _token_projection(
        x, w, compute_dtype=compute_dtype, row_tile=row_tile,
        max_resident_weight_bytes=max_resident_weight_bytes)
    return out, input_mask


if __name__ == "__main__":
    key = jax.random.PRNGKey(0)
    kx, kw, kw2 = jax.random.split(key, 3)

    # batch=2, seq=13 (not a multiple of bucket_size*2=8 -> padding/mask path),
    # hidden=128 (lane-dense output).
    b, t, d = 2, 13, 128
    bucket_size, num_mem_kv, full_attn_thres = 4, 0, 0

    x = jax.random.normal(kx, (b, t, d), dtype=jnp.float32)
    w = jax.random.normal(kw, (d, d), dtype=jnp.float32) * 0.02

    out, mask = autopadder_forward(
        x, w,
        bucket_size=bucket_size,
        num_mem_kv=num_mem_kv,
        full_attn_thres=full_attn_thres,
    )
    out = jax.block_until_ready(out)
    mask = jax.block_until_ready(mask)

    # ---- plain-JAX reference of the same semantics (bf16 compute, f32 accum) ----
    tp = t + _pad_len(t + num_mem_kv, bucket_size * 2)
    ref_out = jnp.einsum(
        'btd,de->bte',
        x.astype(jnp.bfloat16).astype(jnp.float32),
        w.astype(jnp.bfloat16).astype(jnp.float32))
    ref_mask = jnp.pad(jnp.ones((b, t), dtype=jnp.bool_),
                       ((0, 0), (0, tp - t)))

    assert out.shape == (b, t, d)
    assert mask.shape == (b, tp)
    assert jnp.allclose(out, ref_out, atol=1e-2, rtol=1e-2)
    assert jnp.array_equal(mask, ref_mask)

    # ---- also exercise the (rows, N, K)-tiled path (non-resident weight) ----
    d2 = 256
    x2 = jax.random.normal(kx, (b, t, d2), dtype=jnp.float32)
    w2 = jax.random.normal(kw2, (d2, d2), dtype=jnp.float32) * 0.02
    out2, _ = autopadder_forward(
        x2, w2,
        bucket_size=bucket_size,
        num_mem_kv=num_mem_kv,
        full_attn_thres=full_attn_thres,
        max_resident_weight_bytes=0,      # force the tiled/accumulator path
    )
    out2 = jax.block_until_ready(out2)
    ref2 = jnp.einsum(
        'btd,de->bte',
        x2.astype(jnp.bfloat16).astype(jnp.float32),
        w2.astype(jnp.bfloat16).astype(jnp.float32))
    assert jnp.allclose(out2, ref2, atol=1e-2, rtol=1e-2)

    print("KERNEL_OK")
</pallas_src>

<mosaic_0001>
module attributes {stable_mosaic.version = 11 : i64} {
  func.func @_proj_resident_kernel(%arg0: i32, %arg1: i32, %arg2: memref<1x8x128xf32, #tpu.memory_space<vmem>>, %arg3: memref<128x128xbf16, #tpu.memory_space<vmem>>, %arg4: memref<1x8x128xf32, #tpu.memory_space<vmem>>) attributes {dimension_semantics = [#tpu.dimension_semantics<parallel>, #tpu.dimension_semantics<parallel>], iteration_bounds = array<i64: 2, 2>, scalar_prefetch = 0 : i64, scratch_operands = 0 : i64, tpu.core_type = #tpu.core_type<tc>, window_params = [{transform_indices = @transform_0, window_bounds = array<i64: 1, 8, 128>}, {pipeline_mode = #tpu.pipeline_mode<synchronous>, transform_indices = @transform_1, window_bounds = array<i64: 128, 128>}, {transform_indices = @transform_2, window_bounds = array<i64: 1, 8, 128>}]} {
    %c0 = arith.constant 0 : index
    %c0_0 = arith.constant 0 : index
    %c0_1 = arith.constant 0 : index
    %0 = vector.load %arg2[%c0, %c0_0, %c0_1] : memref<1x8x128xf32, #tpu.memory_space<vmem>>, vector<1x8x128xf32>
    %1 = vector.shape_cast %0 : vector<1x8x128xf32> to vector<8x128xf32>
    %2 = arith.truncf %1 : vector<8x128xf32> to vector<8x128xbf16>
    %c0_2 = arith.constant 0 : index
    %c0_3 = arith.constant 0 : index
    %3 = vector.load %arg3[%c0_2, %c0_3] : memref<128x128xbf16, #tpu.memory_space<vmem>>, vector<128x128xbf16>
    %cst = arith.constant dense<0.000000e+00> : vector<8x128xf32>
    %4 = tpu.matmul %2, %3, %cst {dimension_numbers = #tpu.dot_dimension_numbers<[1], [0], [0], [1], [0, 0, 1, 1], [], []>} : vector<8x128xbf16>, vector<128x128xbf16>, vector<8x128xf32> -> vector<8x128xf32>
    %c0_4 = arith.constant 0 : index
    %c0_5 = arith.constant 0 : index
    %c0_6 = arith.constant 0 : index
    %5 = vector.load %arg4[%c0_4, %c0_5, %c0_6] : memref<1x8x128xf32, #tpu.memory_space<vmem>>, vector<1x8x128xf32>
    %6 = vector.shape_cast %5 : vector<1x8x128xf32> to vector<8x128xf32>
    %7 = vector.shape_cast %4 : vector<8x128xf32> to vector<1x8x128xf32>
    tpu.vector_store %arg4[%c0_4, %c0_5, %c0_6], %7 {strides = array<i32>} : memref<1x8x128xf32, #tpu.memory_space<vmem>>, vector<1x8x128xf32>,
    return
  }
  func.func @transform_0(%arg0: i32, %arg1: i32) -> (i32, i32, i32) {
    %c0_i32 = arith.constant 0 : i32
    %c0_i32_0 = arith.constant 0 : i32
    return %arg0, %arg1, %c0_i32 : i32, i32, i32
  }
  func.func @transform_1(%arg0: i32, %arg1: i32) -> (i32, i32) {
    %c0_i32 = arith.constant 0 : i32
    %c0_i32_0 = arith.constant 0 : i32
    %c0_i32_1 = arith.constant 0 : i32
    return %c0_i32, %c0_i32_0 : i32, i32
  }
  func.func @transform_2(%arg0: i32, %arg1: i32) -> (i32, i32, i32) {
    %c0_i32 = arith.constant 0 : i32
    %c0_i32_0 = arith.constant 0 : i32
    return %arg0, %arg1, %c0_i32 : i32, i32, i32
  }
}

module attributes {stable_mosaic.version = 11 : i64} {
  func.func @_proj_resident_kernel(%arg0: i32, %arg1: i32, %arg2: memref<1x8x128xf32, #tpu.memory_space<vmem>>, %arg3: memref<128x128xbf16, #tpu.memory_space<vmem>>, %arg4: memref<1x8x128xf32, #tpu.memory_space<vmem>>) attributes {dimension_semantics = [#tpu.dimension_semantics<parallel>, #tpu.dimension_semantics<parallel>], iteration_bounds = array<i64: 2, 2>, scalar_prefetch = 0 : i64, scratch_operands = 0 : i64, tpu.core_type = #tpu.core_type<tc>, window_params = [{transform_indices = @transform_0, window_bounds = array<i64: 1, 8, 128>}, {pipeline_mode = #tpu.pipeline_mode<synchronous>, transform_indices = @transform_1, window_bounds = array<i64: 128, 128>}, {transform_indices = @transform_2, window_bounds = array<i64: 1, 8, 128>}]} {
    %c0 = arith.constant 0 : index
    %c0_0 = arith.constant 0 : index
    %c0_1 = arith.constant 0 : index
    %0 = vector.load %arg2[%c0, %c0_0, %c0_1] : memref<1x8x128xf32, #tpu.memory_space<vmem>>, vector<1x8x128xf32>
    %1 = vector.shape_cast %0 : vector<1x8x128xf32> to vector<8x128xf32>
    %2 = arith.truncf %1 : vector<8x128xf32> to vector<8x128xbf16>
    %c0_2 = arith.constant 0 : index
    %c0_3 = arith.constant 0 : index
    %3 = vector.load %arg3[%c0_2, %c0_3] : memref<128x128xbf16, #tpu.memory_space<vmem>>, vector<128x128xbf16>
    %cst = arith.constant dense<0.000000e+00> : vector<8x128xf32>
    %4 = tpu.matmul %2, %3, %cst {dimension_numbers = #tpu.dot_dimension_numbers<[1], [0], [0], [1], [0, 0, 1, 1], [], []>} : vector<8x128xbf16>, vector<128x128xbf16>, vector<8x128xf32> -> vector<8x128xf32>
    %c0_4 = arith.constant 0 : index
    %c0_5 = arith.constant 0 : index
    %c0_6 = arith.constant 0 : index
    %5 = vector.load %arg4[%c0_4, %c0_5, %c0_6] : memref<1x8x128xf32, #tpu.memory_space<vmem>>, vector<1x8x128xf32>
    %6 = vector.shape_cast %5 : vector<1x8x128xf32> to vector<8x128xf32>
    %7 = vector.shape_cast %4 : vector<8x128xf32> to vector<1x8x128xf32>
    tpu.vector_store %arg4[%c0_4, %c0_5, %c0_6], %7 {strides = array<i32>} : memref<1x8x128xf32, #tpu.memory_space<vmem>>, vector<1x8x128xf32>,
    return
  }
  func.func @transform_0(%arg0: i32, %arg1: i32) -> (i32, i32, i32) {
    %c0_i32 = arith.constant 0 : i32
    %c0_i32_0 = arith.constant 0 : i32
    return %arg0, %arg1, %c0_i32 : i32, i32, i32
  }
  func.func @transform_1(%arg0: i32, %arg1: i32) -> (i32, i32) {
    %c0_i32 = arith.constant 0 : i32
    %c0_i32_0 = arith.constant 0 : i32
    %c0_i32_1 = arith.constant 0 : i32
    return %c0_i32, %c0_i32_0 : i32, i32
  }
  func.func @transform_2(%arg0: i32, %arg1: i32) -> (i32, i32, i32) {
    %c0_i32 = arith.constant 0 : i32
    %c0_i32_0 = arith.constant 0 : i32
    return %arg0, %arg1, %c0_i32 : i32, i32, i32
  }
}

</mosaic_0001>

<llo_original>
// kernel: tpu_custom_call.1
$region0: #{tpu_custom_call.1}
  #allocation0 [shape = 'u32[]', space=smem, size = 0x4, offset = 0x4, fixed_abs, tag = 'smem constant byte address 0x4 - core index']
  #allocation1 [shape = 'u32[72,128]{1,0:T(1,128)}', space=vmem, size = 0x9000, scoped, tag = 'internal scratch']
  %s0 = inlined_call_operand.vmem [shape: f32[2,13,128], index: 0, kind: input, shape index: {}]
  %s1 = inlined_call_operand.hbm [shape: bf16[128,128], index: 1, kind: input, shape index: {}]
  %s2 = inlined_call_operand.vmem [shape: f32[2,13,128], index: 2, kind: output, shape index: {}]
  %s3 = sld [smem:[#allocation0]]
  $region45: #{tpu_custom_call.1} parent=0
    _
  %s5 = ssub.s32 1, %s3
  %s6 = scalar_select 0, %s5, %s3
  $region1: #{tpu_custom_call.1} parent=0
    #allocation2 [shape = 'u8[32768]{0}', space=vmem, size = 0x8000, scoped, tag = 'input window, operand 1, single buffered']
    #allocation3 [shape = 's32[2]{0}', space=sflag, size = 0x8, scoped, tag = 'scoped memory for tpu_custom_call.1']
    %7 = vsyncpa [#allocation3], 0
    loop: start=0, step=1, limit=6
    $region2: #{tpu_custom_call.1} parent=1 // loop_pre_header
      _
    $region3: #{tpu_custom_call.1} parent=1 // loop_header
      %s9 = sphi 0, %s13
      %p10 = scmp.ge.s32.totalorder %s9, 6
      %s16 = sphi 0, %s28
      %s17 = sphi 0, %s24
      %s18 = sphi 0, %s16
      %s19 = sphi 0, %s17
      %s20 = sphi 0, %s18
      %s21 = sphi 0, %s19
      %s33 = sphi 0, %s35
      %s36 = sphi 0, %s33
      %s37 = sphi 0, %s36
      %s53 = sphi 0, %s37
      %s57 = sphi 0, %s57
      %s59 = sphi 0, %s57
      %s60 = sphi 0, %s59
      %s74 = sphi 0, %s60
      %s82 = sphi 0, %s84
      %s85 = sphi 0, %s82
      %s86 = sphi 0, %s85
      %s102 = sphi 0, %s86
    $region4: #{tpu_custom_call.1} parent=1 // loop_header_branch
      %12 = sbr.rel (%p10) target = $region8
    $region5: #{tpu_custom_call.1} parent=1 // loop_body
      %s14 = ssub.s32 %s9, 1
      %s15 = ssub.s32 %s9, 2
      %s22 = sadd.s32 1, %s17
      %p23 = scmp.ge.s32.totalorder %s22, 2
      %s24 = scalar_select %p23, 0, %s22
      %s25 = sadd.s32 1, %s16
      %s26 = scalar_select %p23, %s25, %s16
      %p27 = scmp.ge.s32.totalorder %s26, 2
      %s28 = scalar_select %p27, 0, %s26
      %s29 = ssub.s32 %s16, %s28
      %s30 = ssub.s32 %s17, %s24
      %s31 = sor.u32 %s29, %s30
      %p32 = scmp.eq.s32.totalorder %s31, 0
      %s34 = sadd.s32 %s33, 1
      %s35 = scalar_select %p32, %s33, %s34
      %p38 = pneg %p32
      %p39 = scmp.eq.s32.totalorder %s9, 3
      %p40 = por %p38, %p39
      %p41 = scmp.ne.s32.totalorder %s33, %s36
      %p42 = scmp.eq.s32.totalorder %s9, 0
      %p43 = por %p41, %p42
      %p44 = scmp.ne.s32.totalorder %s33, %s36
      %p45 = scmp.eq.s32.totalorder %s14, 3
      %p46 = por %p44, %p45
      %p47 = scmp.ne.s32.totalorder %s36, %s37
      %p48 = scmp.eq.s32.totalorder %s14, 0
      %p49 = por %p47, %p48
      %p50 = scmp.ne.s32.totalorder %s36, %s37
      %p51 = scmp.eq.s32.totalorder %s15, 3
      %p52 = por %p50, %p51
      %p54 = scmp.ne.s32.totalorder %s37, %s53
      %p55 = scmp.eq.s32.totalorder %s15, 0
      %p56 = por %p54, %p55
      %s58 = sadd.s32 %s57, 1
      %p61 = scmp.eq.s32.totalorder %s9, 3
      %p62 = scmp.ne.s32.totalorder %s57, %s59
      %p63 = scmp.eq.s32.totalorder %s9, 0
      %p64 = por %p62, %p63
      %p65 = scmp.ne.s32.totalorder %s57, %s59
      %p66 = scmp.eq.s32.totalorder %s14, 3
      %p67 = por %p65, %p66
      %p68 = scmp.ne.s32.totalorder %s59, %s60
      %p69 = scmp.eq.s32.totalorder %s14, 0
      %p70 = por %p68, %p69
      %p71 = scmp.ne.s32.totalorder %s59, %s60
      %p72 = scmp.eq.s32.totalorder %s15, 3
      %p73 = por %p71, %p72
      %p75 = scmp.ne.s32.totalorder %s60, %s74
      %p76 = scmp.eq.s32.totalorder %s15, 0
      %p77 = por %p75, %p76
      %s78 = ssub.s32 %s16, %s28
      %s79 = ssub.s32 %s17, %s24
      %s80 = sor.u32 %s78, %s79
      %p81 = scmp.eq.s32.totalorder %s80, 0
      %s83 = sadd.s32 %s82, 1
      %s84 = scalar_select %p81, %s82, %s83
      %p87 = pneg %p81
      %p88 = scmp.eq.s32.totalorder %s9, 3
      %p89 = por %p87, %p88
      %p90 = scmp.ne.s32.totalorder %s82, %s85
      %p91 = scmp.eq.s32.totalorder %s9, 0
      %p92 = por %p90, %p91
      %p93 = scmp.ne.s32.totalorder %s82, %s85
      %p94 = scmp.eq.s32.totalorder %s14, 3
      %p95 = por %p93, %p94
      %p96 = scmp.ne.s32.totalorder %s85, %s86
      %p97 = scmp.eq.s32.totalorder %s14, 0
      %p98 = por %p96, %p97
      %p99 = scmp.ne.s32.totalorder %s85, %s86
      %p100 = scmp.eq.s32.totalorder %s15, 3
      %p101 = por %p99, %p100
      %p103 = scmp.ne.s32.totalorder %s86, %s102
      %p104 = scmp.eq.s32.totalorder %s15, 0
      %p105 = por %p103, %p104
      %p106 = scmp.le.s32.totalorder 1, %s9
      %p107 = scmp.lt.s32.totalorder %s9, 5
      %p108 = pnand %p106, %p107
      %p109 = pneg %p108
      // Predicated region
      $region9: #{tpu_custom_call.1} parent=5 // pred_check
        _
      $region10: #{tpu_custom_call.1} parent=5 // pred_check_branch
        %111 = sbr.rel (%p108) target = $region12
      $region11: #{tpu_custom_call.1} parent=5 // pred_region
        %s112 = ssub.s32 %s9, 1
        // Predicated region
        $region13: #{tpu_custom_call.1} parent=11 // pred_check
          %p113 = pneg %p70
        $region14: #{tpu_custom_call.1} parent=11 // pred_check_branch
          %115 = sbr.rel (%p113) target = $region16
        $region15: #{tpu_custom_call.1} parent=11 // pred_region
          %117 = vsyncadd [#allocation3], 0
          %s118 = sshll.u32 %s1, 4
          %s119 = int_to_ptr.hbm [resolvable:$true] %s118
          %s120 = sshll.u32 [#allocation2], 4
          %s121 = int_to_ptr.vmem [resolvable:$true] %s120
          %126 = dma.hbm_to_vmem [thread:$0]  %s119, 1024, %s121, [#allocation3], 64, 64, 4
        $region16: #{tpu_custom_call.1} parent=11 // pred_fallthru
          _
      $region12: #{tpu_custom_call.1} parent=5 // pred_fallthru
        _
      %p127 = scmp.lt.s32.totalorder %s9, 4
      // Predicated region
      $region17: #{tpu_custom_call.1} parent=5 // pred_check
        %p128 = pneg %p127
      $region18: #{tpu_custom_call.1} parent=5 // pred_check_branch
        %130 = sbr.rel (%p128) target = $region20
      $region19: #{tpu_custom_call.1} parent=5 // pred_region
        // Predicated region
        $region21: #{tpu_custom_call.1} parent=19 // pred_check
          %p131 = pneg %p43
        $region22: #{tpu_custom_call.1} parent=19 // pred_check_branch
          %133 = sbr.rel (%p131) target = $region24
        $region23: #{tpu_custom_call.1} parent=19 // pred_region
          %p134 = scmp.lt.s32.totalorder %s16, 1
          %s135 = scalar_select %p134, %s16, 1
          %p136 = scmp.lt.s32.totalorder %s17, 1
          %s137 = scalar_select %p136, %s17, 1
          %s138 = smul.addr %s135, 2
          %s139 = sadd.s32 %s137, %s138
          %s140 = smul.addr %s139, 8
          %s141 = scalar_lea.vmem %s0, %s140
        $region24: #{tpu_custom_call.1} parent=19 // pred_fallthru
          _
      $region20: #{tpu_custom_call.1} parent=5 // pred_fallthru
        _
      %p142 = scmp.le.s32.totalorder 1, %s9
      %p143 = scmp.lt.s32.totalorder %s9, 5
      %p144 = pnand %p142, %p143
      %p145 = pneg %p144
      // Predicated region
      $region25: #{tpu_custom_call.1} parent=5 // pred_check
        _
      $region26: #{tpu_custom_call.1} parent=5 // pred_check_branch
        %147 = sbr.rel (%p144) target = $region28
      $region27: #{tpu_custom_call.1} parent=5 // pred_region
        %s148 = ssub.s32 %s9, 1
        // Predicated region
        $region29: #{tpu_custom_call.1} parent=27 // pred_check
          %p149 = pneg %p70
        $region30: #{tpu_custom_call.1} parent=27 // pred_check_branch
          %151 = sbr.rel (%p149) target = $region32
        $region31: #{tpu_custom_call.1} parent=27 // pred_region
          %153 = dma.done [#allocation3], 1024
        $region32: #{tpu_custom_call.1} parent=27 // pred_fallthru
          _
        %p154 = scmp.lt.s32.totalorder %s18, 1
        %s155 = scalar_select %p154, %s18, 1
        %p156 = scmp.lt.s32.totalorder %s19, 1
        %s157 = scalar_select %p156, %s19, 1
        %s158 = smul.addr %s155, 2
        %s159 = sadd.s32 %s157, %s158
        %s160 = smul.addr %s159, 8
        %s161 = scalar_lea.vmem %s0, %s160
        %p162 = pneg %p49
        %p163 = pneg %p46
        %p164 = pneg %p70
        %p165 = pneg %p67
        %p166 = pneg %p98
        %p167 = pneg %p95
        %p168 = scmp.lt.s32.totalorder %s18, 1
        %s169 = scalar_select %p168, %s18, 1
        %p170 = scmp.lt.s32.totalorder %s19, 1
        %s171 = scalar_select %p170, %s19, 1
        %s172 = smul.addr %s169, 2
        %s173 = sadd.s32 %s171, %s172
        %s174 = smul.addr %s173, 8
        %s175 = scalar_lea.vmem %s2, %s174
        %p176 = scmp.lt.s32.totalorder %s18, 1
        %s177 = scalar_select %p176, %s18, 1
        %p178 = scmp.lt.s32.totalorder %s19, 1
        %s179 = scalar_select %p178, %s19, 1
        %s180 = smul.addr %s177, 2
        %s181 = sadd.s32 %s179, %s180
        %s182 = smul.addr %s181, 8
        %s183 = scalar_lea.vmem %s0, %s182
        %p184 = scmp.lt.s32.totalorder %s18, 1
        %s185 = scalar_select %p184, %s18, 1
        %p186 = scmp.lt.s32.totalorder %s19, 1
        %s187 = scalar_select %p186, %s19, 1
        %s188 = smul.addr %s185, 2
        %s189 = sadd.s32 %s187, %s188
        %s190 = smul.addr %s189, 8
        %s191 = scalar_lea.vmem %s2, %s190
        %v192 = vld [vmem:[%s183] sm:$0xff]
        %v193 = vpack.c.bf16 %v192, %v192
        %v194 = vld [vmem:[#allocation2] sm:$0xf]
        %v195 = vld [vmem:[#allocation2 + $0x4] sm:$0xf]
        %v196 = vld [vmem:[#allocation2 + $0x8] sm:$0xf]
        %v197 = vld [vmem:[#allocation2 + $0xc] sm:$0xf]
        %v198 = vld [vmem:[#allocation2 + $0x10] sm:$0xf]
        %v199 = vld [vmem:[#allocation2 + $0x14] sm:$0xf]
        %v200 = vld [vmem:[#allocation2 + $0x18] sm:$0xf]
        %v201 = vld [vmem:[#allocation2 + $0x1c] sm:$0xf]
        %v202 = vld [vmem:[#allocation2 + $0x20] sm:$0xf]
        %v203 = vld [vmem:[#allocation2 + $0x24] sm:$0xf]
        %v204 = vld [vmem:[#allocation2 + $0x28] sm:$0xf]
        %v205 = vld [vmem:[#allocation2 + $0x2c] sm:$0xf]
        %v206 = vld [vmem:[#allocation2 + $0x30] sm:$0xf]
        %v207 = vld [vmem:[#allocation2 + $0x34] sm:$0xf]
        %v208 = vld [vmem:[#allocation2 + $0x38] sm:$0xf]
        %v209 = vld [vmem:[#allocation2 + $0x3c] sm:$0xf]
        %v226 = vunpack.c.l.b16 %v194
        %v227 = vunpack.c.l.b16 %v195
        %v228 = vunpack.c.l.b16 %v196
        %v229 = vunpack.c.l.b16 %v197
        %v230 = vunpack.c.l.b16 %v198
        %v231 = vunpack.c.l.b16 %v199
        %v232 = vunpack.c.l.b16 %v200
        %v233 = vunpack.c.l.b16 %v201
        %v234 = vunpack.c.l.b16 %v202
        %v235 = vunpack.c.l.b16 %v203
        %v236 = vunpack.c.l.b16 %v204
        %v237 = vunpack.c.l.b16 %v205
        %v238 = vunpack.c.l.b16 %v206
        %v239 = vunpack.c.l.b16 %v207
        %v240 = vunpack.c.l.b16 %v208
        %v241 = vunpack.c.l.b16 %v209
        %v242 = vpack.c.b16 %v227, %v226
        %v243 = vpack.c.b16 %v229, %v228
        %v244 = vpack.c.b16 %v231, %v230
        %v245 = vpack.c.b16 %v233, %v232
        %v246 = vpack.c.b16 %v235, %v234
        %v247 = vpack.c.b16 %v237, %v236
        %v248 = vpack.c.b16 %v239, %v238
        %v249 = vpack.c.b16 %v241, %v240
        %258 = vmatpush.bf16.msra.mxu0 %v249
        %259 = vmatpush.bf16.msra.mxu0 %v248
        %260 = vmatpush.bf16.msra.mxu0 %v247
        %261 = vmatpush.bf16.msra.mxu0 %v246
        %262 = vmatpush.bf16.msra.mxu0 %v245
        %263 = vmatpush.bf16.msra.mxu0 %v244
        %264 = vmatpush.bf16.msra.mxu0 %v243
        %265 = vmatpush.bf16.msra.mxu0 %v242
        %266 = vmatmul.bf16.gmra.mxu0 %v193
        %v267 = vpop.f32.mrf.mxu0
        %v268 = vadd.f32 0.0, %v267
        %v269 = vpop.f32.mrf.mxu0
        %270 = vdwg.mxu0
        %271 = vst [vmem:[%s191] sm:$0xff] %v268
        %p272 = scmp.lt.s32.totalorder %s18, 1
        %s273 = scalar_select %p272, %s18, 1
        %p274 = scmp.lt.s32.totalorder %s19, 1
        %s275 = scalar_select %p274, %s19, 1
        %s276 = smul.addr %s273, 2
        %s277 = sadd.s32 %s275, %s276
        %s278 = smul.addr %s277, 8
        %s279 = scalar_lea.vmem %s2, %s278
        // Predicated region
        $region33: #{tpu_custom_call.1} parent=27 // pred_check
          %p280 = pneg %p95
        $region34: #{tpu_custom_call.1} parent=27 // pred_check_branch
          %282 = sbr.rel (%p280) target = $region36
        $region35: #{tpu_custom_call.1} parent=27 // pred_region
          _
        $region36: #{tpu_custom_call.1} parent=27 // pred_fallthru
          _
      $region28: #{tpu_custom_call.1} parent=5 // pred_fallthru
        _
      %p283 = scmp.le.s32.totalorder 2, %s9
      // Predicated region
      $region37: #{tpu_custom_call.1} parent=5 // pred_check
        %p284 = pneg %p283
      $region38: #{tpu_custom_call.1} parent=5 // pred_check_branch
        %286 = sbr.rel (%p284) target = $region40
      $region39: #{tpu_custom_call.1} parent=5 // pred_region
        %s287 = ssub.s32 %s9, 2
        // Predicated region
        $region41: #{tpu_custom_call.1} parent=39 // pred_check
          %p288 = pneg %p101
        $region42: #{tpu_custom_call.1} parent=39 // pred_check_branch
          %290 = sbr.rel (%p288) target = $region44
        $region43: #{tpu_custom_call.1} parent=39 // pred_region
          %p291 = scmp.lt.s32.totalorder %s20, 1
          %s292 = scalar_select %p291, %s20, 1
          %p293 = scmp.lt.s32.totalorder %s21, 1
          %s294 = scalar_select %p293, %s21, 1
          %s295 = smul.addr %s292, 2
          %s296 = sadd.s32 %s294, %s295
          %s297 = smul.addr %s296, 8
          %s298 = scalar_lea.vmem %s2, %s297
        $region44: #{tpu_custom_call.1} parent=39 // pred_fallthru
          _
      $region40: #{tpu_custom_call.1} parent=5 // pred_fallthru
        _
    $region6: #{tpu_custom_call.1} parent=1 // loop_footer
      %s13 = sadd.s32 1, %s9
    $region7: #{tpu_custom_call.1} parent=1 // loop_footer_branch
      %8 = sbr.rel target = $region3
    $region8: #{tpu_custom_call.1} parent=1 // loop_exit
      _
    %299 = vsyncpa [#allocation3], 1
    %s300 = scalar_lea.sflag [#allocation3], 1
    %301 = vsyncpa %s300, 1

// kernel: tpu_custom_call.1
$region0: #{tpu_custom_call.1}
  #allocation0 [shape = 'u32[]', space=smem, size = 0x4, offset = 0x4, fixed_abs, tag = 'smem constant byte address 0x4 - core index']
  #allocation1 [shape = 'u32[72,128]{1,0:T(1,128)}', space=vmem, size = 0x9000, scoped, tag = 'internal scratch']
  %s0 = inlined_call_operand.vmem [shape: f32[2,13,128], index: 0, kind: input, shape index: {}]
  %s1 = inlined_call_operand.hbm [shape: bf16[128,128], index: 1, kind: input, shape index: {}]
  %s2 = inlined_call_operand.vmem [shape: f32[2,13,128], index: 2, kind: output, shape index: {}]
  %s3 = sld [smem:[#allocation0]]
  $region45: #{tpu_custom_call.1} parent=0
    _
  %s5 = ssub.s32 1, %s3
  %s6 = scalar_select 0, %s5, %s3
  $region1: #{tpu_custom_call.1} parent=0
    #allocation2 [shape = 'u8[32768]{0}', space=vmem, size = 0x8000, scoped, tag = 'input window, operand 1, single buffered']
    #allocation3 [shape = 's32[2]{0}', space=sflag, size = 0x8, scoped, tag = 'scoped memory for tpu_custom_call.1']
    %7 = vsyncpa [#allocation3], 0
    loop: start=0, step=1, limit=6
    $region2: #{tpu_custom_call.1} parent=1 // loop_pre_header
      _
    $region3: #{tpu_custom_call.1} parent=1 // loop_header
      %s9 = sphi 0, %s13
      %p10 = scmp.ge.s32.totalorder %s9, 6
      %s16 = sphi 0, %s28
      %s17 = sphi 0, %s24
      %s18 = sphi 0, %s16
      %s19 = sphi 0, %s17
      %s20 = sphi 0, %s18
      %s21 = sphi 0, %s19
      %s33 = sphi 0, %s35
      %s36 = sphi 0, %s33
      %s37 = sphi 0, %s36
      %s53 = sphi 0, %s37
      %s57 = sphi 0, %s57
      %s59 = sphi 0, %s57
      %s60 = sphi 0, %s59
      %s74 = sphi 0, %s60
      %s82 = sphi 0, %s84
      %s85 = sphi 0, %s82
      %s86 = sphi 0, %s85
      %s102 = sphi 0, %s86
    $region4: #{tpu_custom_call.1} parent=1 // loop_header_branch
      %12 = sbr.rel (%p10) target = $region8
    $region5: #{tpu_custom_call.1} parent=1 // loop_body
      %s14 = ssub.s32 %s9, 1
      %s15 = ssub.s32 %s9, 2
      %s22 = sadd.s32 1, %s17
      %p23 = scmp.ge.s32.totalorder %s22, 2
      %s24 = scalar_select %p23, 0, %s22
      %s25 = sadd.s32 1, %s16
      %s26 = scalar_select %p23, %s25, %s16
      %p27 = scmp.ge.s32.totalorder %s26, 2
      %s28 = scalar_select %p27, 0, %s26
      %s29 = ssub.s32 %s16, %s28
      %s30 = ssub.s32 %s17, %s24
      %s31 = sor.u32 %s29, %s30
      %p32 = scmp.eq.s32.totalorder %s31, 0
      %s34 = sadd.s32 %s33, 1
      %s35 = scalar_select %p32, %s33, %s34
      %p38 = pneg %p32
      %p39 = scmp.eq.s32.totalorder %s9, 3
      %p40 = por %p38, %p39
      %p41 = scmp.ne.s32.totalorder %s33, %s36
      %p42 = scmp.eq.s32.totalorder %s9, 0
      %p43 = por %p41, %p42
      %p44 = scmp.ne.s32.totalorder %s33, %s36
      %p45 = scmp.eq.s32.totalorder %s14, 3
      %p46 = por %p44, %p45
      %p47 = scmp.ne.s32.totalorder %s36, %s37
      %p48 = scmp.eq.s32.totalorder %s14, 0
      %p49 = por %p47, %p48
      %p50 = scmp.ne.s32.totalorder %s36, %s37
      %p51 = scmp.eq.s32.totalorder %s15, 3
      %p52 = por %p50, %p51
      %p54 = scmp.ne.s32.totalorder %s37, %s53
      %p55 = scmp.eq.s32.totalorder %s15, 0
      %p56 = por %p54, %p55
      %s58 = sadd.s32 %s57, 1
      %p61 = scmp.eq.s32.totalorder %s9, 3
      %p62 = scmp.ne.s32.totalorder %s57, %s59
      %p63 = scmp.eq.s32.totalorder %s9, 0
      %p64 = por %p62, %p63
      %p65 = scmp.ne.s32.totalorder %s57, %s59
      %p66 = scmp.eq.s32.totalorder %s14, 3
      %p67 = por %p65, %p66
      %p68 = scmp.ne.s32.totalorder %s59, %s60
      %p69 = scmp.eq.s32.totalorder %s14, 0
      %p70 = por %p68, %p69
      %p71 = scmp.ne.s32.totalorder %s59, %s60
      %p72 = scmp.eq.s32.totalorder %s15, 3
      %p73 = por %p71, %p72
      %p75 = scmp.ne.s32.totalorder %s60, %s74
      %p76 = scmp.eq.s32.totalorder %s15, 0
      %p77 = por %p75, %p76
      %s78 = ssub.s32 %s16, %s28
      %s79 = ssub.s32 %s17, %s24
      %s80 = sor.u32 %s78, %s79
      %p81 = scmp.eq.s32.totalorder %s80, 0
      %s83 = sadd.s32 %s82, 1
      %s84 = scalar_select %p81, %s82, %s83
      %p87 = pneg %p81
      %p88 = scmp.eq.s32.totalorder %s9, 3
      %p89 = por %p87, %p88
      %p90 = scmp.ne.s32.totalorder %s82, %s85
      %p91 = scmp.eq.s32.totalorder %s9, 0
      %p92 = por %p90, %p91
      %p93 = scmp.ne.s32.totalorder %s82, %s85
      %p94 = scmp.eq.s32.totalorder %s14, 3
      %p95 = por %p93, %p94
      %p96 = scmp.ne.s32.totalorder %s85, %s86
      %p97 = scmp.eq.s32.totalorder %s14, 0
      %p98 = por %p96, %p97
      %p99 = scmp.ne.s32.totalorder %s85, %s86
      %p100 = scmp.eq.s32.totalorder %s15, 3
      %p101 = por %p99, %p100
      %p103 = scmp.ne.s32.totalorder %s86, %s102
      %p104 = scmp.eq.s32.totalorder %s15, 0
      %p105 = por %p103, %p104
      %p106 = scmp.le.s32.totalorder 1, %s9
      %p107 = scmp.lt.s32.totalorder %s9, 5
      %p108 = pnand %p106, %p107
      %p109 = pneg %p108
      // Predicated region
      $region9: #{tpu_custom_call.1} parent=5 // pred_check
        _
      $region10: #{tpu_custom_call.1} parent=5 // pred_check_branch
        %111 = sbr.rel (%p108) target = $region12
      $region11: #{tpu_custom_call.1} parent=5 // pred_region
        %s112 = ssub.s32 %s9, 1
        // Predicated region
        $region13: #{tpu_custom_call.1} parent=11 // pred_check
          %p113 = pneg %p70
        $region14: #{tpu_custom_call.1} parent=11 // pred_check_branch
          %115 = sbr.rel (%p113) target = $region16
        $region15: #{tpu_custom_call.1} parent=11 // pred_region
          %117 = vsyncadd [#allocation3], 0
          %s118 = sshll.u32 %s1, 4
          %s119 = int_to_ptr.hbm [resolvable:$true] %s118
          %s120 = sshll.u32 [#allocation2], 4
          %s121 = int_to_ptr.vmem [resolvable:$true] %s120
          %126 = dma.hbm_to_vmem [thread:$0]  %s119, 1024, %s121, [#allocation3], 64, 64, 4
        $region16: #{tpu_custom_call.1} parent=11 // pred_fallthru
          _
      $region12: #{tpu_custom_call.1} parent=5 // pred_fallthru
        _
      %p127 = scmp.lt.s32.totalorder %s9, 4
      // Predicated region
      $region17: #{tpu_custom_call.1} parent=5 // pred_check
        %p128 = pneg %p127
      $region18: #{tpu_custom_call.1} parent=5 // pred_check_branch
        %130 = sbr.rel (%p128) target = $region20
      $region19: #{tpu_custom_call.1} parent=5 // pred_region
        // Predicated region
        $region21: #{tpu_custom_call.1} parent=19 // pred_check
          %p131 = pneg %p43
        $region22: #{tpu_custom_call.1} parent=19 // pred_check_branch
          %133 = sbr.rel (%p131) target = $region24
        $region23: #{tpu_custom_call.1} parent=19 // pred_region
          %p134 = scmp.lt.s32.totalorder %s16, 1
          %s135 = scalar_select %p134, %s16, 1
          %p136 = scmp.lt.s32.totalorder %s17, 1
          %s137 = scalar_select %p136, %s17, 1
          %s138 = smul.addr %s135, 2
          %s139 = sadd.s32 %s137, %s138
          %s140 = smul.addr %s139, 8
          %s141 = scalar_lea.vmem %s0, %s140
        $region24: #{tpu_custom_call.1} parent=19 // pred_fallthru
          _
      $region20: #{tpu_custom_call.1} parent=5 // pred_fallthru
        _
      %p142 = scmp.le.s32.totalorder 1, %s9
      %p143 = scmp.lt.s32.totalorder %s9, 5
      %p144 = pnand %p142, %p143
      %p145 = pneg %p144
      // Predicated region
      $region25: #{tpu_custom_call.1} parent=5 // pred_check
        _
      $region26: #{tpu_custom_call.1} parent=5 // pred_check_branch
        %147 = sbr.rel (%p144) target = $region28
      $region27: #{tpu_custom_call.1} parent=5 // pred_region
        %s148 = ssub.s32 %s9, 1
        // Predicated region
        $region29: #{tpu_custom_call.1} parent=27 // pred_check
          %p149 = pneg %p70
        $region30: #{tpu_custom_call.1} parent=27 // pred_check_branch
          %151 = sbr.rel (%p149) target = $region32
        $region31: #{tpu_custom_call.1} parent=27 // pred_region
          %153 = dma.done [#allocation3], 1024
        $region32: #{tpu_custom_call.1} parent=27 // pred_fallthru
          _
        %p154 = scmp.lt.s32.totalorder %s18, 1
        %s155 = scalar_select %p154, %s18, 1
        %p156 = scmp.lt.s32.totalorder %s19, 1
        %s157 = scalar_select %p156, %s19, 1
        %s158 = smul.addr %s155, 2
        %s159 = sadd.s32 %s157, %s158
        %s160 = smul.addr %s159, 8
        %s161 = scalar_lea.vmem %s0, %s160
        %p162 = pneg %p49
        %p163 = pneg %p46
        %p164 = pneg %p70
        %p165 = pneg %p67
        %p166 = pneg %p98
        %p167 = pneg %p95
        %p168 = scmp.lt.s32.totalorder %s18, 1
        %s169 = scalar_select %p168, %s18, 1
        %p170 = scmp.lt.s32.totalorder %s19, 1
        %s171 = scalar_select %p170, %s19, 1
        %s172 = smul.addr %s169, 2
        %s173 = sadd.s32 %s171, %s172
        %s174 = smul.addr %s173, 8
        %s175 = scalar_lea.vmem %s2, %s174
        %p176 = scmp.lt.s32.totalorder %s18, 1
        %s177 = scalar_select %p176, %s18, 1
        %p178 = scmp.lt.s32.totalorder %s19, 1
        %s179 = scalar_select %p178, %s19, 1
        %s180 = smul.addr %s177, 2
        %s181 = sadd.s32 %s179, %s180
        %s182 = smul.addr %s181, 8
        %s183 = scalar_lea.vmem %s0, %s182
        %p184 = scmp.lt.s32.totalorder %s18, 1
        %s185 = scalar_select %p184, %s18, 1
        %p186 = scmp.lt.s32.totalorder %s19, 1
        %s187 = scalar_select %p186, %s19, 1
        %s188 = smul.addr %s185, 2
        %s189 = sadd.s32 %s187, %s188
        %s190 = smul.addr %s189, 8
        %s191 = scalar_lea.vmem %s2, %s190
        %v192 = vld [vmem:[%s183] sm:$0xff]
        %v193 = vpack.c.bf16 %v192, %v192
        %v194 = vld [vmem:[#allocation2] sm:$0xf]
        %v195 = vld [vmem:[#allocation2 + $0x4] sm:$0xf]
        %v196 = vld [vmem:[#allocation2 + $0x8] sm:$0xf]
        %v197 = vld [vmem:[#allocation2 + $0xc] sm:$0xf]
        %v198 = vld [vmem:[#allocation2 + $0x10] sm:$0xf]
        %v199 = vld [vmem:[#allocation2 + $0x14] sm:$0xf]
        %v200 = vld [vmem:[#allocation2 + $0x18] sm:$0xf]
        %v201 = vld [vmem:[#allocation2 + $0x1c] sm:$0xf]
        %v202 = vld [vmem:[#allocation2 + $0x20] sm:$0xf]
        %v203 = vld [vmem:[#allocation2 + $0x24] sm:$0xf]
        %v204 = vld [vmem:[#allocation2 + $0x28] sm:$0xf]
        %v205 = vld [vmem:[#allocation2 + $0x2c] sm:$0xf]
        %v206 = vld [vmem:[#allocation2 + $0x30] sm:$0xf]
        %v207 = vld [vmem:[#allocation2 + $0x34] sm:$0xf]
        %v208 = vld [vmem:[#allocation2 + $0x38] sm:$0xf]
        %v209 = vld [vmem:[#allocation2 + $0x3c] sm:$0xf]
        %v226 = vunpack.c.l.b16 %v194
        %v227 = vunpack.c.l.b16 %v195
        %v228 = vunpack.c.l.b16 %v196
        %v229 = vunpack.c.l.b16 %v197
        %v230 = vunpack.c.l.b16 %v198
        %v231 = vunpack.c.l.b16 %v199
        %v232 = vunpack.c.l.b16 %v200
        %v233 = vunpack.c.l.b16 %v201
        %v234 = vunpack.c.l.b16 %v202
        %v235 = vunpack.c.l.b16 %v203
        %v236 = vunpack.c.l.b16 %v204
        %v237 = vunpack.c.l.b16 %v205
        %v238 = vunpack.c.l.b16 %v206
        %v239 = vunpack.c.l.b16 %v207
        %v240 = vunpack.c.l.b16 %v208
        %v241 = vunpack.c.l.b16 %v209
        %v242 = vpack.c.b16 %v227, %v226
        %v243 = vpack.c.b16 %v229, %v228
        %v244 = vpack.c.b16 %v231, %v230
        %v245 = vpack.c.b16 %v233, %v232
        %v246 = vpack.c.b16 %v235, %v234
        %v247 = vpack.c.b16 %v237, %v236
        %v248 = vpack.c.b16 %v239, %v238
        %v249 = vpack.c.b16 %v241, %v240
        %258 = vmatpush.bf16.msra.mxu0 %v249
        %259 = vmatpush.bf16.msra.mxu0 %v248
        %260 = vmatpush.bf16.msra.mxu0 %v247
        %261 = vmatpush.bf16.msra.mxu0 %v246
        %262 = vmatpush.bf16.msra.mxu0 %v245
        %263 = vmatpush.bf16.msra.mxu0 %v244
        %264 = vmatpush.bf16.msra.mxu0 %v243
        %265 = vmatpush.bf16.msra.mxu0 %v242
        %266 = vmatmul.bf16.gmra.mxu0 %v193
        %v267 = vpop.f32.mrf.mxu0
        %v268 = vadd.f32 0.0, %v267
        %v269 = vpop.f32.mrf.mxu0
        %270 = vdwg.mxu0
        %271 = vst [vmem:[%s191] sm:$0xff] %v268
        %p272 = scmp.lt.s32.totalorder %s18, 1
        %s273 = scalar_select %p272, %s18, 1
        %p274 = scmp.lt.s32.totalorder %s19, 1
        %s275 = scalar_select %p274, %s19, 1
        %s276 = smul.addr %s273, 2
        %s277 = sadd.s32 %s275, %s276
        %s278 = smul.addr %s277, 8
        %s279 = scalar_lea.vmem %s2, %s278
        // Predicated region
        $region33: #{tpu_custom_call.1} parent=27 // pred_check
          %p280 = pneg %p95
        $region34: #{tpu_custom_call.1} parent=27 // pred_check_branch
          %282 = sbr.rel (%p280) target = $region36
        $region35: #{tpu_custom_call.1} parent=27 // pred_region
          _
        $region36: #{tpu_custom_call.1} parent=27 // pred_fallthru
          _
      $region28: #{tpu_custom_call.1} parent=5 // pred_fallthru
        _
      %p283 = scmp.le.s32.totalorder 2, %s9
      // Predicated region
      $region37: #{tpu_custom_call.1} parent=5 // pred_check
        %p284 = pneg %p283
      $region38: #{tpu_custom_call.1} parent=5 // pred_check_branch
        %286 = sbr.rel (%p284) target = $region40
      $region39: #{tpu_custom_call.1} parent=5 // pred_region
        %s287 = ssub.s32 %s9, 2
        // Predicated region
        $region41: #{tpu_custom_call.1} parent=39 // pred_check
          %p288 = pneg %p101
        $region42: #{tpu_custom_call.1} parent=39 // pred_check_branch
          %290 = sbr.rel (%p288) target = $region44
        $region43: #{tpu_custom_call.1} parent=39 // pred_region
          %p291 = scmp.lt.s32.totalorder %s20, 1
          %s292 = scalar_select %p291, %s20, 1
          %p293 = scmp.lt.s32.totalorder %s21, 1
          %s294 = scalar_select %p293, %s21, 1
          %s295 = smul.addr %s292, 2
          %s296 = sadd.s32 %s294, %s295
          %s297 = smul.addr %s296, 8
          %s298 = scalar_lea.vmem %s2, %s297
        $region44: #{tpu_custom_call.1} parent=39 // pred_fallthru
          _
      $region40: #{tpu_custom_call.1} parent=5 // pred_fallthru
        _
    $region6: #{tpu_custom_call.1} parent=1 // loop_footer
      %s13 = sadd.s32 1, %s9
    $region7: #{tpu_custom_call.1} parent=1 // loop_footer_branch
      %8 = sbr.rel target = $region3
    $region8: #{tpu_custom_call.1} parent=1 // loop_exit
      _
    %299 = vsyncpa [#allocation3], 1
    %s300 = scalar_lea.sflag [#allocation3], 1
    %301 = vsyncpa %s300, 1

</llo_original>
